<compile_context>
chip_gen: v7x
topology: tpu7x:2x2x1
jax: 0.10.0
libtpu: 0.0.40
codegen_flags: <defaults>
</compile_context>

<pallas_src>
import functools

import jax
import jax.numpy as jnp
from jax.experimental import pallas as pl
from jax.experimental.pallas import tpu as pltpu

_BN_EPS = 1e-5
_NEG_INF = -1e30


def server_mlp_kernel(x_ref, w1_ref, gb_ref, w2_ref, b2_ref, o_ref, *,
                      tile_h, w2_resident):
    """One H-tile of the ServerMLP forward pass.

    x_ref:  (B, I)      bf16, resident
    w1_ref: (1, I, tH)  bf16 tile (contiguous slab of the (nH, I, tH) layout)
    gb_ref: (2, tH)     f32 tile; row 0 = gamma, row 1 = beta
    w2_ref: (H, O_pad)  bf16 resident   OR   (tH, O_pad) bf16 streamed tile
    b2_ref: (1, O_pad)  f32, resident (padded entries = -1e30)
    o_ref:  (B, O_pad)  f32 output block, used directly as the accumulator
    """
    h_idx = pl.program_id(0)

    @pl.when(h_idx == 0)
    def _():
        o_ref[...] = jnp.zeros_like(o_ref)

    # fc1 partial: bf16 operands, f32 MXU accumulation.  The fc1 bias is
    # omitted on purpose: a per-column constant cancels exactly in
    # (h - mean(h)) / std(h).
    h = jnp.dot(x_ref[...], w1_ref[0],
                preferred_element_type=jnp.float32)             # (B, tH) f32

    # BatchNorm1d with batch statistics (track_running_stats=False), biased
    # variance.  Single reduction pass (s1/s2), folded into one FMA.
    inv_b = 1.0 / h.shape[0]
    s1 = jnp.sum(h, axis=0, keepdims=True)                      # (1, tH)
    s2 = jnp.sum(h * h, axis=0, keepdims=True)                  # (1, tH)
    mean = s1 * inv_b
    var = s2 * inv_b - mean * mean
    scale = gb_ref[0:1, :] * jax.lax.rsqrt(var + _BN_EPS)       # gamma row
    shift = gb_ref[1:2, :] - mean * scale                       # beta row
    h = jnp.maximum(h * scale + shift, 0.0)                     # BN + ReLU

    # fc2 partial product, accumulated in-place in the resident f32 output.
    if w2_resident:
        start = pl.multiple_of(h_idx * tile_h, tile_h)
        w2 = w2_ref[pl.ds(start, tile_h), :]
    else:
        w2 = w2_ref[...]
    o_ref[...] += jnp.dot(h.astype(jnp.bfloat16), w2,
                          preferred_element_type=jnp.float32)

    @pl.when(h_idx == pl.num_programs(0) - 1)
    def _():
        # Bias + numerically-stable log_softmax.  Padded columns carry a
        # -1e30 bias, so exp() underflows to 0 and they do not perturb lse.
        y = o_ref[...] + b2_ref[...]                            # (B, O_pad)
        m = jnp.max(y, axis=1, keepdims=True)
        shifted = y - m
        lse = jnp.log(jnp.sum(jnp.exp(shifted), axis=1, keepdims=True))
        o_ref[...] = shifted - lse


def _round_up(x, m):
    return ((x + m - 1) // m) * m


def _vmem_capacity_bytes():
    try:
        return int(pltpu.get_tpu_info().vmem_capacity_bytes)
    except Exception:
        return 64 << 20   # conservative fallback (v7x per-TensorCore VMEM)


def _plan(B, I, H, O_pad, tile_h=None):
    """Pick (tH, w2_resident, vmem_limit_bytes) from the per-chip VMEM budget."""
    bf16, f32 = 2, 4
    cap = _vmem_capacity_bytes()
    budget = int(0.70 * cap)

    # Buffers whose footprint does not depend on tH (x, output block, b2),
    # counted double-buffered to be conservative.
    base = 2 * B * I * bf16 + 2 * B * O_pad * f32 + 2 * O_pad * f32
    if base > budget:
        # TODO(synk): in-kernel batch split would need a two-pass BN.
        raise ValueError(
            f"resident x/output blocks ({base / 2**20:.1f} MiB) exceed the "
            f"VMEM budget ({budget / 2**20:.1f} MiB); split the batch outside "
            "the kernel")

    w2_full = H * O_pad * bf16

    def cost(th, w2_res):
        per_step = 2 * I * th * bf16 + 2 * 2 * th * f32      # W1 + gamma/beta
        w2 = w2_full if w2_res else 2 * th * O_pad * bf16
        live = 4 * B * th * f32                              # h + temporaries
        return base + per_step + w2 + live

    if tile_h is not None:
        if tile_h != H and (H % tile_h or tile_h % 128):
            raise ValueError("tile_h must divide H and be a multiple of 128")
        cands = [tile_h]
    else:
        # Largest first: full H, then 128-aligned divisors of H.
        cands = [H] + [t for t in range(128 * (H // 128), 0, -128) if H % t == 0]

    for th in cands:
        res_opts = (True, False) if w2_full <= budget // 4 else (False,)
        for w2_res in res_opts:
            need = cost(th, w2_res)
            if need <= budget:
                limit = min(max(int(1.3 * need), 32 << 20), int(0.75 * cap))
                return th, w2_res, limit
    # Nothing fit cleanly: take the smallest candidate and the max budget.
    return cands[-1], False, int(0.75 * cap)


@functools.partial(jax.jit, static_argnames=("tile_h",))
def server_mlp_forward(x, w1, b1, gamma, beta, w2, b2, *, tile_h=None):
    """ServerMLP forward.  b1 is accepted for parity with nn.Linear but is a
    mathematical no-op: a per-feature constant cancels under BatchNorm."""
    del b1
    B, I = x.shape
    H = w1.shape[1]
    O = w2.shape[1]
    O_pad = _round_up(O, 128)

    tH, w2_resident, vmem_limit = _plan(B, I, H, O_pad, tile_h)
    nH = H // tH

    # bf16 matmul operands.  W1 is re-laid-out to (nH, I, tH) so each grid
    # step's tile is a single contiguous DMA; gamma/beta merged into one array.
    x_bf = x.astype(jnp.bfloat16)
    w1_t = jnp.transpose(w1.reshape(I, nH, tH), (1, 0, 2)).astype(jnp.bfloat16)
    gb = jnp.concatenate([gamma.reshape(1, H), beta.reshape(1, H)], axis=0)
    # Zero-pad W2 columns to a lane-dense width; padded logits get -1e30 bias.
    w2_p = jnp.zeros((H, O_pad), jnp.bfloat16).at[:, :O].set(
        w2.astype(jnp.bfloat16))
    b2_p = jnp.full((1, O_pad), _NEG_INF, jnp.float32).at[:, :O].set(
        b2.reshape(1, O))

    if w2_resident:
        w2_spec = pl.BlockSpec((H, O_pad), lambda h: (0, 0))
    else:
        w2_spec = pl.BlockSpec((tH, O_pad), lambda h: (h, 0))

    kernel = functools.partial(server_mlp_kernel, tile_h=tH,
                               w2_resident=w2_resident)

    cost = pl.CostEstimate(
        flops=2 * B * (I * H + H * O_pad),
        transcendentals=H + B * O_pad,          # rsqrt per column + exp per logit
        bytes_accessed=(B * I * 2 + I * H * 2 + H * O_pad * 2
                        + 2 * H * 4 + O_pad * 4 + B * O_pad * 4),
    )

    out = pl.pallas_call(
        kernel,
        out_shape=jax.ShapeDtypeStruct((B, O_pad), jnp.float32),
        grid_spec=pltpu.PrefetchScalarGridSpec(
            num_scalar_prefetch=0,
            grid=(nH,),
            in_specs=[
                pl.BlockSpec((B, I), lambda h: (0, 0)),         # x (resident)
                pl.BlockSpec((1, I, tH), lambda h: (h, 0, 0)),  # W1 tile
                pl.BlockSpec((2, tH), lambda h: (0, h)),        # gamma/beta tile
                w2_spec,                                        # W2
                pl.BlockSpec((1, O_pad), lambda h: (0, 0)),     # b2 (resident)
            ],
            out_specs=pl.BlockSpec((B, O_pad), lambda h: (0, 0)),
        ),
        compiler_params=pltpu.CompilerParams(
            dimension_semantics=("arbitrary",),
            vmem_limit_bytes=vmem_limit,
        ),
        cost_estimate=cost,
    )(x_bf, w1_t, gb, w2_p, b2_p)

    return out[:, :O]


def init_params(key, input_size, hidden_size, output_size):
    """nn.Linear default init (U(+/- 1/sqrt(fan_in))); BN affine defaults."""
    k1, k2, k3, k4 = jax.random.split(key, 4)
    lim1 = 1.0 / jnp.sqrt(jnp.float32(input_size))
    lim2 = 1.0 / jnp.sqrt(jnp.float32(hidden_size))
    w1 = jax.random.uniform(k1, (input_size, hidden_size), jnp.float32, -lim1, lim1)
    b1 = jax.random.uniform(k2, (1, hidden_size), jnp.float32, -lim1, lim1)
    w2 = jax.random.uniform(k3, (hidden_size, output_size), jnp.float32, -lim2, lim2)
    b2 = jax.random.uniform(k4, (1, output_size), jnp.float32, -lim2, lim2)
    gamma = jnp.ones((1, hidden_size), jnp.float32)
    beta = jnp.zeros((1, hidden_size), jnp.float32)
    return w1, b1, gamma, beta, w2, b2


def reference_forward(x, w1, b1, gamma, beta, w2, b2):
    """Pure-JAX f32 reference with PyTorch semantics (including b1)."""
    h = x @ w1 + b1
    mean = jnp.mean(h, axis=0, keepdims=True)
    var = jnp.mean((h - mean) ** 2, axis=0, keepdims=True)
    h = (h - mean) / jnp.sqrt(var + _BN_EPS)
    h = h * gamma + beta
    h = jnp.maximum(h, 0.0)
    y = h @ w2 + b2
    return jax.nn.log_softmax(y, axis=1)


if __name__ == "__main__":
    key = jax.random.PRNGKey(0)

    configs = [
        # (batch, input, hidden, output, forced tile_h)
        (8, 32, 64, 10, None),     # single H tile; O padded 10 -> 128
        (16, 128, 256, 16, 128),   # 2 H tiles: exercises accumulation + slicing
    ]
    for (B, I, H, O, th) in configs:
        kx, kp, kg, kb, key = jax.random.split(key, 5)
        x = jax.random.normal(kx, (B, I), jnp.float32)
        params = list(init_params(kp, I, H, O))
        # Perturb BN affine params so the test exercises the scale/shift path.
        params[2] = 1.0 + 0.1 * jax.random.normal(kg, (1, H), jnp.float32)
        params[3] = 0.1 * jax.random.normal(kb, (1, H), jnp.float32)

        out = jax.block_until_ready(server_mlp_forward(x, *params, tile_h=th))
        ref = reference_forward(x, *params)
        assert out.shape == (B, O)
        # bf16 matmul operands loosen the match vs the f32 reference.
        assert jnp.allclose(out, ref, atol=5e-2, rtol=5e-2), (
            f"mismatch vs reference for B={B} I={I} H={H} O={O}")

    print("KERNEL_OK")
</pallas_src>

<mosaic_0001>
module attributes {stable_mosaic.version = 11 : i64} {
  func.func @server_mlp_kernel(%arg0: i32, %arg1: memref<8x32xbf16, #tpu.memory_space<vmem>>, %arg2: memref<1x32x64xbf16, #tpu.memory_space<vmem>>, %arg3: memref<2x64xf32, #tpu.memory_space<vmem>>, %arg4: memref<64x128xbf16, #tpu.memory_space<vmem>>, %arg5: memref<1x128xf32, #tpu.memory_space<vmem>>, %arg6: memref<8x128xf32, #tpu.memory_space<vmem>>) attributes {dimension_semantics = [#tpu.dimension_semantics<arbitrary>], iteration_bounds = array<i64: 1>, scalar_prefetch = 0 : i64, scratch_operands = 0 : i64, tpu.core_type = #tpu.core_type<tc>, window_params = [{pipeline_mode = #tpu.pipeline_mode<synchronous>, transform_indices = @transform_0, window_bounds = array<i64: 8, 32>}, {transform_indices = @transform_1, window_bounds = array<i64: 1, 32, 64>}, {transform_indices = @transform_2, window_bounds = array<i64: 2, 64>}, {pipeline_mode = #tpu.pipeline_mode<synchronous>, transform_indices = @transform_3, window_bounds = array<i64: 64, 128>}, {pipeline_mode = #tpu.pipeline_mode<synchronous>, transform_indices = @transform_4, window_bounds = array<i64: 1, 128>}, {pipeline_mode = #tpu.pipeline_mode<synchronous>, transform_indices = @transform_5, window_bounds = array<i64: 8, 128>}]} {
    %c0_i32 = arith.constant 0 : i32
    %0 = arith.cmpi eq, %arg0, %c0_i32 : i32
    %1 = arith.extui %0 : i1 to i32
    %c0_i32_0 = arith.constant 0 : i32
    %2 = arith.cmpi ne, %1, %c0_i32_0 : i32
    scf.if %2 {
      %cst_22 = arith.constant 0.000000e+00 : f32
      %44 = vector.broadcast %cst_22 : f32 to vector<8x128xf32>
      %c0_23 = arith.constant 0 : index
      %c0_24 = arith.constant 0 : index
      %45 = vector.load %arg6[%c0_23, %c0_24] : memref<8x128xf32, #tpu.memory_space<vmem>>, vector<8x128xf32>
      tpu.vector_store %arg6[%c0_23, %c0_24], %44 {strides = array<i32>} : memref<8x128xf32, #tpu.memory_space<vmem>>, vector<8x128xf32>,
    } else {
    }
    %c0 = arith.constant 0 : index
    %c0_1 = arith.constant 0 : index
    %3 = vector.load %arg1[%c0, %c0_1] : memref<8x32xbf16, #tpu.memory_space<vmem>>, vector<8x32xbf16>
    %c0_2 = arith.constant 0 : index
    %c0_3 = arith.constant 0 : index
    %c0_4 = arith.constant 0 : index
    %4 = vector.load %arg2[%c0_2, %c0_3, %c0_4] : memref<1x32x64xbf16, #tpu.memory_space<vmem>>, vector<1x32x64xbf16>
    %5 = vector.shape_cast %4 : vector<1x32x64xbf16> to vector<32x64xbf16>
    %cst = arith.constant dense<0.000000e+00> : vector<8x64xf32>
    %6 = tpu.matmul %3, %5, %cst {dimension_numbers = #tpu.dot_dimension_numbers<[1], [0], [0], [1], [0, 0, 1, 1], [], []>} : vector<8x32xbf16>, vector<32x64xbf16>, vector<8x64xf32> -> vector<8x64xf32>
    %cst_5 = arith.constant dense<0.000000e+00> : vector<64xf32>
    %7 = vector.multi_reduction <add>, %6, %cst_5 [0] : vector<8x64xf32> to vector<64xf32>
    %8 = vector.shape_cast %7 : vector<64xf32> to vector<1x64xf32>
    %9 = arith.mulf %6, %6 : vector<8x64xf32>
    %cst_6 = arith.constant dense<0.000000e+00> : vector<64xf32>
    %10 = vector.multi_reduction <add>, %9, %cst_6 [0] : vector<8x64xf32> to vector<64xf32>
    %11 = vector.shape_cast %10 : vector<64xf32> to vector<1x64xf32>
    %cst_7 = arith.constant 1.250000e-01 : f32
    %12 = vector.broadcast %cst_7 : f32 to vector<1x64xf32>
    %13 = arith.mulf %8, %12 : vector<1x64xf32>
    %cst_8 = arith.constant 1.250000e-01 : f32
    %14 = vector.broadcast %cst_8 : f32 to vector<1x64xf32>
    %15 = arith.mulf %11, %14 : vector<1x64xf32>
    %16 = arith.mulf %13, %13 : vector<1x64xf32>
    %17 = arith.subf %15, %16 : vector<1x64xf32>
    %c0_9 = arith.constant 0 : index
    %c0_10 = arith.constant 0 : index
    %18 = vector.load %arg3[%c0_9, %c0_10] : memref<2x64xf32, #tpu.memory_space<vmem>>, vector<1x64xf32>
    %cst_11 = arith.constant 9.99999974E-6 : f32
    %19 = vector.broadcast %cst_11 : f32 to vector<1x64xf32>
    %20 = arith.addf %17, %19 : vector<1x64xf32>
    %21 = math.rsqrt %20 : vector<1x64xf32>
    %22 = arith.mulf %18, %21 : vector<1x64xf32>
    %c1 = arith.constant 1 : index
    %c0_12 = arith.constant 0 : index
    %23 = vector.load %arg3[%c1, %c0_12] : memref<2x64xf32, #tpu.memory_space<vmem>>, vector<1x64xf32>
    %24 = arith.mulf %13, %22 : vector<1x64xf32>
    %25 = arith.subf %23, %24 : vector<1x64xf32>
    %26 = vector.broadcast %22 : vector<1x64xf32> to vector<8x64xf32>
    %27 = arith.mulf %6, %26 : vector<8x64xf32>
    %28 = vector.broadcast %25 : vector<1x64xf32> to vector<8x64xf32>
    %29 = arith.addf %27, %28 : vector<8x64xf32>
    %cst_13 = arith.constant 0.000000e+00 : f32
    %30 = vector.broadcast %cst_13 : f32 to vector<8x64xf32>
    %31 = arith.maximumf %29, %30 : vector<8x64xf32>
    %c64_i32 = arith.constant 64 : i32
    %32 = arith.muli %arg0, %c64_i32 : i32
    %33 = tpu.assume_multiple %32, 64 : i32
    %34 = arith.index_cast %33 : i32 to index
    %c0_14 = arith.constant 0 : index
    %35 = vector.load %arg4[%34, %c0_14] : memref<64x128xbf16, #tpu.memory_space<vmem>>, vector<64x128xbf16>
    %c0_15 = arith.constant 0 : index
    %c0_16 = arith.constant 0 : index
    %36 = vector.load %arg6[%c0_15, %c0_16] : memref<8x128xf32, #tpu.memory_space<vmem>>, vector<8x128xf32>
    %37 = arith.truncf %31 : vector<8x64xf32> to vector<8x64xbf16>
    %cst_17 = arith.constant dense<0.000000e+00> : vector<8x128xf32>
    %38 = tpu.matmul %37, %35, %cst_17 {dimension_numbers = #tpu.dot_dimension_numbers<[1], [0], [0], [1], [0, 0, 1, 1], [], []>} : vector<8x64xbf16>, vector<64x128xbf16>, vector<8x128xf32> -> vector<8x128xf32>
    %39 = arith.addf %36, %38 : vector<8x128xf32>
    %c0_18 = arith.constant 0 : index
    %c0_19 = arith.constant 0 : index
    %40 = vector.load %arg6[%c0_18, %c0_19] : memref<8x128xf32, #tpu.memory_space<vmem>>, vector<8x128xf32>
    tpu.vector_store %arg6[%c0_18, %c0_19], %39 {strides = array<i32>} : memref<8x128xf32, #tpu.memory_space<vmem>>, vector<8x128xf32>,
    %c0_i32_20 = arith.constant 0 : i32
    %41 = arith.cmpi eq, %arg0, %c0_i32_20 : i32
    %42 = arith.extui %41 : i1 to i32
    %c0_i32_21 = arith.constant 0 : i32
    %43 = arith.cmpi ne, %42, %c0_i32_21 : i32
    scf.if %43 {
      %c0_22 = arith.constant 0 : index
      %c0_23 = arith.constant 0 : index
      %44 = vector.load %arg6[%c0_22, %c0_23] : memref<8x128xf32, #tpu.memory_space<vmem>>, vector<8x128xf32>
      %c0_24 = arith.constant 0 : index
      %c0_25 = arith.constant 0 : index
      %45 = vector.load %arg5[%c0_24, %c0_25] : memref<1x128xf32, #tpu.memory_space<vmem>>, vector<1x128xf32>
      %46 = vector.broadcast %45 : vector<1x128xf32> to vector<8x128xf32>
      %47 = arith.addf %44, %46 : vector<8x128xf32>
      %cst_26 = arith.constant dense<0xFF800000> : vector<8xf32>
      %48 = vector.multi_reduction <maximumf>, %47, %cst_26 [1] : vector<8x128xf32> to vector<8xf32>
      %49 = vector.shape_cast %48 : vector<8xf32> to vector<8x1xf32>
      %50 = vector.broadcast %49 : vector<8x1xf32> to vector<8x128xf32>
      %51 = arith.subf %47, %50 : vector<8x128xf32>
      %52 = math.exp %51 : vector<8x128xf32>
      %cst_27 = arith.constant dense<0.000000e+00> : vector<8xf32>
      %53 = vector.multi_reduction <add>, %52, %cst_27 [1] : vector<8x128xf32> to vector<8xf32>
      %54 = vector.shape_cast %53 : vector<8xf32> to vector<8x1xf32>
      %55 = math.log %54 : vector<8x1xf32>
      %56 = vector.broadcast %55 : vector<8x1xf32> to vector<8x128xf32>
      %57 = arith.subf %51, %56 : vector<8x128xf32>
      %c0_28 = arith.constant 0 : index
      %c0_29 = arith.constant 0 : index
      %58 = vector.load %arg6[%c0_28, %c0_29] : memref<8x128xf32, #tpu.memory_space<vmem>>, vector<8x128xf32>
      tpu.vector_store %arg6[%c0_28, %c0_29], %57 {strides = array<i32>} : memref<8x128xf32, #tpu.memory_space<vmem>>, vector<8x128xf32>,
    } else {
    }
    return
  }
  func.func @transform_0(%arg0: i32) -> (i32, i32) {
    %c0_i32 = arith.constant 0 : i32
    %c0_i32_0 = arith.constant 0 : i32
    %c0_i32_1 = arith.constant 0 : i32
    return %c0_i32, %c0_i32_0 : i32, i32
  }
  func.func @transform_1(%arg0: i32) -> (i32, i32, i32) {
    %c0_i32 = arith.constant 0 : i32
    %c0_i32_0 = arith.constant 0 : i32
    %c0_i32_1 = arith.constant 0 : i32
    return %arg0, %c0_i32, %c0_i32_0 : i32, i32, i32
  }
  func.func @transform_2(%arg0: i32) -> (i32, i32) {
    %c0_i32 = arith.constant 0 : i32
    %c0_i32_0 = arith.constant 0 : i32
    return %c0_i32, %arg0 : i32, i32
  }
  func.func @transform_3(%arg0: i32) -> (i32, i32) {
    %c0_i32 = arith.constant 0 : i32
    %c0_i32_0 = arith.constant 0 : i32
    %c0_i32_1 = arith.constant 0 : i32
    return %c0_i32, %c0_i32_0 : i32, i32
  }
  func.func @transform_4(%arg0: i32) -> (i32, i32) {
    %c0_i32 = arith.constant 0 : i32
    %c0_i32_0 = arith.constant 0 : i32
    %c0_i32_1 = arith.constant 0 : i32
    return %c0_i32, %c0_i32_0 : i32, i32
  }
  func.func @transform_5(%arg0: i32) -> (i32, i32) {
    %c0_i32 = arith.constant 0 : i32
    %c0_i32_0 = arith.constant 0 : i32
    %c0_i32_1 = arith.constant 0 : i32
    return %c0_i32, %c0_i32_0 : i32, i32
  }
}

</mosaic_0001>

<llo_original>
// kernel: server_mlp_forward.1
$region0: #{server_mlp_forward.1}
  #allocation0 [shape = 'u32[]', space=smem, size = 0x4, offset = 0x4, fixed_abs, tag = 'smem constant byte address 0x4 - core index']
  #allocation1 [shape = 'u32[144,128]{1,0:T(1,128)}', space=vmem, size = 0x12000, scoped, tag = 'internal scratch']
  %s0 = inlined_call_operand.vmem [shape: bf16[8,32], index: 0, kind: input, shape index: {}]
  %s1 = inlined_call_operand.vmem [shape: bf16[1,32,64], index: 1, kind: input, shape index: {}]
  %s2 = inlined_call_operand.vmem [shape: f32[2,64], index: 2, kind: input, shape index: {}]
  %s3 = inlined_call_operand.vmem [shape: bf16[64,128], index: 3, kind: input, shape index: {}]
  %s4 = inlined_call_operand.vmem [shape: f32[1,128], index: 4, kind: input, shape index: {}]
  %s5 = inlined_call_operand.hbm [shape: f32[8,128], index: 5, kind: output, shape index: {}]
  %s6 = sld [smem:[#allocation0]]
  $region38: #{server_mlp_forward.1} parent=0
    _
  %s8 = ssub.s32 1, %s6
  %s9 = scalar_select 0, %s8, %s6
  $region1: #{server_mlp_forward.1} parent=0
    #allocation2 [shape = 'u8[4096]{0}', space=vmem, size = 0x1000, scoped, tag = 'output window, operand 0, single buffered']
    #allocation3 [shape = 's32[1]{0}', space=sflag, size = 0x4, scoped, tag = 'scoped memory for server_mlp_forward.1']
    %10 = vsyncpa [#allocation3], 0
    // Predicated region
    $region2: #{server_mlp_forward.1} parent=1 // pred_check
      _
    $region3: #{server_mlp_forward.1} parent=1 // pred_check_branch
      %12 = sbr.rel (0) target = $region5
    $region4: #{server_mlp_forward.1} parent=1 // pred_region
      _
    $region5: #{server_mlp_forward.1} parent=1 // pred_fallthru
      _
    // Predicated region
    $region6: #{server_mlp_forward.1} parent=1 // pred_check
      _
    $region7: #{server_mlp_forward.1} parent=1 // pred_check_branch
      %14 = sbr.rel (0) target = $region9
    $region8: #{server_mlp_forward.1} parent=1 // pred_region
      _
    $region9: #{server_mlp_forward.1} parent=1 // pred_fallthru
      _
    // Predicated region
    $region10: #{server_mlp_forward.1} parent=1 // pred_check
      _
    $region11: #{server_mlp_forward.1} parent=1 // pred_check_branch
      %16 = sbr.rel (0) target = $region13
    $region12: #{server_mlp_forward.1} parent=1 // pred_region
      _
    $region13: #{server_mlp_forward.1} parent=1 // pred_fallthru
      _
    // Predicated region
    $region14: #{server_mlp_forward.1} parent=1 // pred_check
      _
    $region15: #{server_mlp_forward.1} parent=1 // pred_check_branch
      %18 = sbr.rel (0) target = $region17
    $region16: #{server_mlp_forward.1} parent=1 // pred_region
      _
    $region17: #{server_mlp_forward.1} parent=1 // pred_fallthru
      _
    // Predicated region
    $region18: #{server_mlp_forward.1} parent=1 // pred_check
      _
    $region19: #{server_mlp_forward.1} parent=1 // pred_check_branch
      %20 = sbr.rel (0) target = $region21
    $region20: #{server_mlp_forward.1} parent=1 // pred_region
      _
    $region21: #{server_mlp_forward.1} parent=1 // pred_fallthru
      _
    %p22 = scmp.eq.s32.totalorder 0, 0
    // Predicated region
    $region22: #{server_mlp_forward.1} parent=1 // pred_check
      %p23 = pneg %p22
    $region23: #{server_mlp_forward.1} parent=1 // pred_check_branch
      %25 = sbr.rel (%p23) target = $region25
    $region24: #{server_mlp_forward.1} parent=1 // pred_region
      %26 = vst [vmem:[#allocation2] sm:$0xff] 0.0
    $region25: #{server_mlp_forward.1} parent=1 // pred_fallthru
      _
    %v27 = vld [vmem:[%s0] sm:$0xf]
    %v28 = vld [vmem:[%s1] sm:$0xf]
    %v29 = vld [vmem:[%s1 + $0x4] sm:$0xf]
    %v30 = vld [vmem:[%s1 + $0x8] sm:$0xf]
    %v31 = vld [vmem:[%s1 + $0xc] sm:$0xf]
    %v36 = vunpack.c.l.b16 %v28
    %v37 = vunpack.c.l.b16 %v29
    %v38 = vunpack.c.l.b16 %v30
    %v39 = vunpack.c.l.b16 %v31
    %v40 = vpack.c.b16 %v37, %v36
    %v41 = vpack.c.b16 %v39, %v38
    %vm44 = vcmask 261120
    %v46 = vsel %vm44, %v27, 0
    %48 = vmatprep.subr.bf16.mxu0 0
    %49 = vmatpush1.bf16.msra.mxu0 %v40
    %50 = vmatprep.subr.bf16.mxu0 0
    %51 = vmatpush1.bf16.msra.mxu0 %v41
    %52 = vmatprep.subr.bf16.mxu0 0
    %53 = vmatpush1.bf16.msra.mxu0 0
    %54 = vmatprep.subr.bf16.mxu0 0
    %55 = vmatpush1.bf16.msra.mxu0 0
    %56 = vmatprep.subr.bf16.mxu0 0
    %57 = vmatpush1.bf16.msra.mxu0 0
    %58 = vmatprep.subr.bf16.mxu0 0
    %59 = vmatpush1.bf16.msra.mxu0 0
    %60 = vmatprep.subr.bf16.mxu0 0
    %61 = vmatpush1.bf16.msra.mxu0 0
    %62 = vmatprep.subr.bf16.mxu0 0
    %63 = vmatpush1.bf16.msra.mxu0 0
    %64 = vmatprep.subr.bf16.mxu0 0
    %65 = vmatpush1.bf16.msra.mxu0 0
    %66 = vmatprep.subr.bf16.mxu0 0
    %67 = vmatpush1.bf16.msra.mxu0 0
    %68 = vmatprep.subr.bf16.mxu0 0
    %69 = vmatpush1.bf16.msra.mxu0 0
    %70 = vmatprep.subr.bf16.mxu0 0
    %71 = vmatpush1.bf16.msra.mxu0 0
    %72 = vmatprep.subr.bf16.mxu0 0
    %73 = vmatpush1.bf16.msra.mxu0 0
    %74 = vmatprep.subr.bf16.mxu0 0
    %75 = vmatpush1.bf16.msra.mxu0 0
    %76 = vmatprep.subr.bf16.mxu0 0
    %77 = vmatpush1.bf16.msra.mxu0 0
    %78 = vmatprep.subr.bf16.mxu0 0
    %79 = vmatpush1.bf16.msra.mxu0 0
    %80 = vmatprep.mubr.bf16.mxu0 0
    %81 = vmatmul.mubr.bf16.gmra.mrb[0].mxu0 %v46
    %v82 = vpop.f32.mrb[0].mxu0
    %v83 = vadd.f32 0.0, %v82
    %v84 = vpop.f32.mrb[0].mxu0
    %v85 = vpop.f32.mrb[0].mxu0
    %v86 = vpop.f32.mrb[0].mxu0
    %87 = vdwg.mxu0
    %vm88 = vcmask 523264
    %v89 = vsel %vm88, %v83, 0.0
    %v90 = vrot.slane %v89, 4
    %v91 = vadd.f32 %v89, %v90
    %v92 = vrot.slane %v91, 2
    %v93 = vadd.f32 %v91, %v92
    %v94 = vrot.slane %v93, 1
    %v95 = vadd.f32 %v93, %v94
    %v96 = vmul.f32 %v83, %v83
    %v97 = vsel %vm88, %v96, 0.0
    %v98 = vrot.slane %v97, 4
    %v99 = vadd.f32 %v97, %v98
    %v100 = vrot.slane %v99, 2
    %v101 = vadd.f32 %v99, %v100
    %v102 = vrot.slane %v101, 1
    %v103 = vadd.f32 %v101, %v102
    %v104 = vmul.f32 %v95, 0.125
    %v105 = vmul.f32 %v103, 0.125
    %v106 = vmul.f32 %v104, %v104
    %v107 = vsub.f32 %v105, %v106
    %v108 = vld [vmem:[%s2] sm:$0x1]
    %v109 = vadd.f32 %v107, 1e-05
    %v110 = vrsqrt.pop %v109
    %v111 = vmul.f32 %v108, %v110
    %v112 = vld [vmem:[%s2 + $0x1] sm:$0x1]
    %v113 = vmul.f32 %v104, %v111
    %v114 = vsub.f32 %v112, %v113
    %v115 = vlaneseq
    %v116 = vshrl.u32 %v115, 7
    %v117 = vsub.s32 0, %v116
    %v118 = vrot.slane %v111, %v117
    %v119 = vmul.f32 %v83, %v118
    %v120 = vlaneseq
    %v121 = vshrl.u32 %v120, 7
    %v122 = vsub.s32 0, %v121
    %v123 = vrot.slane %v114, %v122
    %v124 = vadd.f32 %v119, %v123
    %v125 = vmax.f32 %v124, 0.0
    %s126 = smul.u32 0, 64
    %s127 = sshra.s32 %s126, 3
    %s128 = sand.u32 %s126, 7
    %s129 = smul.addr %s127, 4
    %s130 = scalar_lea.vmem %s3, %s129
    %v131 = vld [vmem:[%s130] sm:$0xf]
    %v132 = vld [vmem:[%s130 + $0x4] sm:$0xf]
    %v133 = vld [vmem:[%s130 + $0x8] sm:$0xf]
    %v134 = vld [vmem:[%s130 + $0xc] sm:$0xf]
    %v135 = vld [vmem:[%s130 + $0x10] sm:$0xf]
    %v136 = vld [vmem:[%s130 + $0x14] sm:$0xf]
    %v137 = vld [vmem:[%s130 + $0x18] sm:$0xf]
    %v138 = vld [vmem:[%s130 + $0x1c] sm:$0xf]
    %v139 = vld [vmem:[#allocation2] sm:$0xff]
    %v140 = vpack.c.bf16 %v125, %v125
    %v149 = vunpack.c.l.b16 %v131
    %v150 = vunpack.c.l.b16 %v132
    %v151 = vunpack.c.l.b16 %v133
    %v152 = vunpack.c.l.b16 %v134
    %v153 = vunpack.c.l.b16 %v135
    %v154 = vunpack.c.l.b16 %v136
    %v155 = vunpack.c.l.b16 %v137
    %v156 = vunpack.c.l.b16 %v138
    %v157 = vpack.c.b16 %v150, %v149
    %v158 = vpack.c.b16 %v152, %v151
    %v159 = vpack.c.b16 %v154, %v153
    %v160 = vpack.c.b16 %v156, %v155
    %v166 = vsel %vm88, %v140, 0
    %168 = vmatprep.subr.bf16.mxu0 0
    %169 = vmatpush1.bf16.msra.mxu0 %v157
    %170 = vmatprep.subr.bf16.mxu0 0
    %171 = vmatpush1.bf16.msra.mxu0 %v158
    %172 = vmatprep.subr.bf16.mxu0 0
    %173 = vmatpush1.bf16.msra.mxu0 %v159
    %174 = vmatprep.subr.bf16.mxu0 0
    %175 = vmatpush1.bf16.msra.mxu0 %v160
    %176 = vmatprep.subr.bf16.mxu0 0
    %177 = vmatpush1.bf16.msra.mxu0 0
    %178 = vmatprep.subr.bf16.mxu0 0
    %179 = vmatpush1.bf16.msra.mxu0 0
    %180 = vmatprep.subr.bf16.mxu0 0
    %181 = vmatpush1.bf16.msra.mxu0 0
    %182 = vmatprep.subr.bf16.mxu0 0
    %183 = vmatpush1.bf16.msra.mxu0 0
    %184 = vmatprep.subr.bf16.mxu0 0
    %185 = vmatpush1.bf16.msra.mxu0 0
    %186 = vmatprep.subr.bf16.mxu0 0
    %187 = vmatpush1.bf16.msra.mxu0 0
    %188 = vmatprep.subr.bf16.mxu0 0
    %189 = vmatpush1.bf16.msra.mxu0 0
    %190 = vmatprep.subr.bf16.mxu0 0
    %191 = vmatpush1.bf16.msra.mxu0 0
    %192 = vmatprep.subr.bf16.mxu0 0
    %193 = vmatpush1.bf16.msra.mxu0 0
    %194 = vmatprep.subr.bf16.mxu0 0
    %195 = vmatpush1.bf16.msra.mxu0 0
    %196 = vmatprep.subr.bf16.mxu0 0
    %197 = vmatpush1.bf16.msra.mxu0 0
    %198 = vmatprep.subr.bf16.mxu0 0
    %199 = vmatpush1.bf16.msra.mxu0 0
    %200 = vmatprep.mubr.bf16.mxu0 0
    %201 = vmatmul.mubr.bf16.gmra.mrb[0].mxu0 %v166
    %v202 = vpop.f32.mrb[0].mxu0
    %v203 = vadd.f32 0.0, %v202
    %v204 = vpop.f32.mrb[0].mxu0
    %v205 = vpop.f32.mrb[0].mxu0
    %v206 = vpop.f32.mrb[0].mxu0
    %207 = vdwg.mxu0
    %v208 = vadd.f32 %v139, %v203
    %209 = vst [vmem:[#allocation2] sm:$0xff] %v208
    // Predicated region
    $region26: #{server_mlp_forward.1} parent=1 // pred_check
      %p210 = pneg %p22
    $region27: #{server_mlp_forward.1} parent=1 // pred_check_branch
      %212 = sbr.rel (%p210) target = $region29
    $region28: #{server_mlp_forward.1} parent=1 // pred_region
      %v213 = vld [vmem:[#allocation2] sm:$0xff]
      %v214 = vld [vmem:[%s4] sm:$0x1]
      %v216 = vlaneseq
      %v217 = vshrl.u32 %v216, 7
      %v218 = vsub.s32 0, %v217
      %v219 = vrot.slane %v214, %v218
      %v221 = vadd.f32 %v213, %v219
      %222 = vmax.xlane.f32.xlu0 %v221
      %v223 = vpop.xlane.xlu0 %222
      %v224 = vsub.f32 %v221, %v223
      %v225 = vmul.f32 %v224, 1.442695
      %v226 = vpow.pop %v225
      %227 = vadd.xlane.f32.xlu0 %v226
      %v228 = vpop.xlane.xlu0 %227
      %v229 = vlog2.pop %v228
      %v230 = vmul.f32 %v229, 0.6931472
      %v231 = vsub.f32 %v224, %v230
      %232 = vst [vmem:[#allocation2] sm:$0xff] %v231
    $region29: #{server_mlp_forward.1} parent=1 // pred_fallthru
      _
    // Predicated region
    $region30: #{server_mlp_forward.1} parent=1 // pred_check
      _
    $region31: #{server_mlp_forward.1} parent=1 // pred_check_branch
      %234 = sbr.rel (0) target = $region33
    $region32: #{server_mlp_forward.1} parent=1 // pred_region
      %s236 = ssub.s32 128, 128
      %237 = vsyncadd [#allocation3], %s236
      %s239 = sshll.u32 [#allocation2], 4
      %s240 = int_to_ptr.vmem [resolvable:$true] %s239
      %242 = dma.vmem_to_hbm [thread:$0]  %s240, 128, %s5, [#allocation3]
    $region33: #{server_mlp_forward.1} parent=1 // pred_fallthru
      _
    // Predicated region
    $region34: #{server_mlp_forward.1} parent=1 // pred_check
      _
    $region35: #{server_mlp_forward.1} parent=1 // pred_check_branch
      %244 = sbr.rel (0) target = $region37
    $region36: #{server_mlp_forward.1} parent=1 // pred_region
      %245 = dma.done [#allocation3], 128
    $region37: #{server_mlp_forward.1} parent=1 // pred_fallthru
      _
    %246 = vsyncpa [#allocation3], 1

</llo_original>
